<compile_context>
chip_gen: v7x
topology: tpu7x:2x2x1
jax: 0.10.0
libtpu: 0.0.40
codegen_flags: <defaults>
</compile_context>

<pallas_src>
import functools

import jax
import jax.numpy as jnp
from jax.experimental import pallas as pl
from jax.experimental.pallas import tpu as pltpu

_MIB = 1024 * 1024


def _vmem_capacity_bytes():
    try:
        return int(pltpu.get_tpu_info().vmem_capacity_bytes)
    except Exception:
        return 64 * _MIB  # conservative fallback (v7x per-core VMEM)


# -----------------------------------------------------------------------------
# Kernels.
#   x_ref    : (tb, HW, tc)  NHWC-flattened feature tile (channels on lanes)
#   w1m_ref  : (tc, N1)      folded W1 rows that multiply the MAX-pooled features
#   w1a_ref  : (tc, N1)      folded W1 rows that multiply the SUM-pooled features (1/HW folded in)
#   b*_ref   : (1, N*)       folded biases (f32);  w2/w3: folded Linear 2/3 weights
# -----------------------------------------------------------------------------
def _pool_head_resident_kernel(x_ref, w1m_ref, w1a_ref, b1_ref, w2_ref, b2_ref,
                               w3_ref, b3_ref, out_ref):
    """grid = (batch tiles,). All weights VMEM-resident (constant index maps)."""
    x = x_ref[...]                                    # input dtype (bf16 in deployment)
    mx = jnp.max(x, axis=1)                           # global max pool (exact in bf16)
    sm = jnp.sum(x, axis=1, dtype=jnp.float32)        # global sum; 1/HW folded into W1_avg
    h = (jnp.dot(mx.astype(w1m_ref.dtype), w1m_ref[...], preferred_element_type=jnp.float32)
         + jnp.dot(sm.astype(w1a_ref.dtype), w1a_ref[...], preferred_element_type=jnp.float32)
         + b1_ref[...])
    h = jnp.maximum(h, 0.0).astype(w2_ref.dtype)
    h = jnp.dot(h, w2_ref[...], preferred_element_type=jnp.float32) + b2_ref[...]
    h = jnp.maximum(h, 0.0).astype(w3_ref.dtype)
    y = jnp.dot(h, w3_ref[...], preferred_element_type=jnp.float32) + b3_ref[...]
    out_ref[...] = y.astype(out_ref.dtype)


def _pool_head_streamed_kernel(x_ref, w1m_ref, w1a_ref, b1_ref, w2_ref, b2_ref,
                               w3_ref, b3_ref, out_ref, acc_ref):
    """grid = (batch tiles, channel tiles); channel axis is the K reduction of matmul 1."""
    c = pl.program_id(1)

    @pl.when(c == 0)
    def _():
        acc_ref[...] = jnp.zeros_like(acc_ref)

    x = x_ref[...]
    mx = jnp.max(x, axis=1)
    sm = jnp.sum(x, axis=1, dtype=jnp.float32)
    acc_ref[...] += (
        jnp.dot(mx.astype(w1m_ref.dtype), w1m_ref[...], preferred_element_type=jnp.float32)
        + jnp.dot(sm.astype(w1a_ref.dtype), w1a_ref[...], preferred_element_type=jnp.float32))

    @pl.when(c == pl.num_programs(1) - 1)
    def _():
        h = jnp.maximum(acc_ref[...] + b1_ref[...], 0.0).astype(w2_ref.dtype)
        h = jnp.dot(h, w2_ref[...], preferred_element_type=jnp.float32) + b2_ref[...]
        h = jnp.maximum(h, 0.0).astype(w3_ref.dtype)
        y = jnp.dot(h, w3_ref[...], preferred_element_type=jnp.float32) + b3_ref[...]
        out_ref[...] = y.astype(out_ref.dtype)


# -----------------------------------------------------------------------------
# Tiling / VMEM planning.
# -----------------------------------------------------------------------------
def _batch_tile_candidates(B, max_tb=256):
    cap = min(B, max_tb)
    if B >= 16:
        cap = min(cap, B // 2)   # >= 2 "parallel" batch blocks so v7x can use both TCs
    cands = [t for t in range(cap, 7, -1) if B % t == 0 and t % 8 == 0]
    return cands or [B]          # tiny / awkward B: single full-batch tile


def _channel_tile_candidates(C, include_full=True):
    cands = [C] if include_full else []
    cands += [t for t in (1024, 512, 256, 128) if t < C and C % t == 0]
    return cands


def _footprint_bytes(tb, HW, tc, N1, N2, NPAD, x_bytes, w_bytes, resident):
    xbuf = 2 * tb * HW * tc * x_bytes                                 # double-buffered features
    w1 = 2 * tc * N1 * w_bytes * (1 if resident else 2)               # max + avg halves
    consts = (N1 + N2 + NPAD) * 4 + (N1 * N2 + N2 * NPAD) * w_bytes   # Buffered(1) operands
    out = 2 * tb * NPAD * 4
    acc = 0 if resident else tb * N1 * 4
    temps = 2 * tb * (max(N1, NPAD) + tc) * 4                         # live intermediates headroom
    return xbuf + w1 + consts + out + acc + temps


def _choose_tiles(B, HW, C, N1, N2, NPAD, x_bytes, w_bytes, budget, force_stream):
    b_cands = _batch_tile_candidates(B)
    if not force_stream:
        # Pass 1: W1 VMEM-resident (read from HBM exactly once per call).
        for tb in b_cands:
            if _footprint_bytes(tb, HW, C, N1, N2, NPAD, x_bytes, w_bytes, True) <= budget:
                return tb, C
    stream_tcs = _channel_tile_candidates(C, include_full=False)
    if stream_tcs:
        # Pass 2: stream W1 in channel tiles (K-reduction grid + accumulator).
        for tb in b_cands:
            for tc in stream_tcs:
                if _footprint_bytes(tb, HW, tc, N1, N2, NPAD, x_bytes, w_bytes, False) <= budget:
                    return tb, tc
    # Nothing fits the budget: fall back to the smallest configuration.
    tb = b_cands[-1]
    tc = stream_tcs[-1] if stream_tcs else C
    return tb, tc


# -----------------------------------------------------------------------------
# Fused forward: AdaptiveConcatPool2d(1) + Flatten + folded fc head (eval mode).
# -----------------------------------------------------------------------------
@functools.partial(jax.jit, static_argnames=("n_out", "force_stream"))
def residual_flower_forward(feat_nhwc, params, *, n_out, force_stream=False):
    """feat_nhwc: (B, H, W, C) last backbone feature map, NHWC (stream in bf16).
    Returns (B, n_out) f32 logits."""
    B, H, W, C = feat_nhwc.shape
    HW = H * W
    x = feat_nhwc.reshape(B, HW, C)            # free reshape — no transpose, no HBM copy

    # Pad awkward batch sizes to a sublane-aligned size so the batch tile stays bounded.
    Bp = B
    if B > 8 and B % 8 != 0:
        Bp = (B + 7) // 8 * 8
        x = jnp.pad(x, ((0, Bp - B), (0, 0), (0, 0)))

    N1 = params["w1_max"].shape[1]
    N2 = params["w2"].shape[1]
    NPAD = params["w3"].shape[1]
    x_bytes = jnp.dtype(x.dtype).itemsize
    w_bytes = jnp.dtype(params["w1_max"].dtype).itemsize

    capacity = _vmem_capacity_bytes()
    tb, tc = _choose_tiles(Bp, HW, C, N1, N2, NPAD, x_bytes, w_bytes,
                           budget=int(capacity * 0.7), force_stream=force_stream)
    resident = (tc == C)
    fp = _footprint_bytes(tb, HW, tc, N1, N2, NPAD, x_bytes, w_bytes, resident)
    vmem_limit = min(int(capacity * 0.9), max(32 * _MIB, int(fp * 1.5)))

    const = dict(pipeline_mode=pl.Buffered(1))   # single-buffer constant-index operands

    if resident:
        grid_spec = pltpu.PrefetchScalarGridSpec(
            num_scalar_prefetch=0,
            grid=(Bp // tb,),
            in_specs=[
                pl.BlockSpec((tb, HW, C), lambda b: (b, 0, 0)),
                pl.BlockSpec((C, N1), lambda b: (0, 0), **const),
                pl.BlockSpec((C, N1), lambda b: (0, 0), **const),
                pl.BlockSpec((1, N1), lambda b: (0, 0), **const),
                pl.BlockSpec((N1, N2), lambda b: (0, 0), **const),
                pl.BlockSpec((1, N2), lambda b: (0, 0), **const),
                pl.BlockSpec((N2, NPAD), lambda b: (0, 0), **const),
                pl.BlockSpec((1, NPAD), lambda b: (0, 0), **const),
            ],
            out_specs=pl.BlockSpec((tb, NPAD), lambda b: (b, 0)),
        )
        kernel = _pool_head_resident_kernel
        dims = ("parallel",)
    else:
        grid_spec = pltpu.PrefetchScalarGridSpec(
            num_scalar_prefetch=0,
            grid=(Bp // tb, C // tc),
            in_specs=[
                pl.BlockSpec((tb, HW, tc), lambda b, c: (b, 0, c)),
                pl.BlockSpec((tc, N1), lambda b, c: (c, 0)),
                pl.BlockSpec((tc, N1), lambda b, c: (c, 0)),
                pl.BlockSpec((1, N1), lambda b, c: (0, 0), **const),
                pl.BlockSpec((N1, N2), lambda b, c: (0, 0), **const),
                pl.BlockSpec((1, N2), lambda b, c: (0, 0), **const),
                pl.BlockSpec((N2, NPAD), lambda b, c: (0, 0), **const),
                pl.BlockSpec((1, NPAD), lambda b, c: (0, 0), **const),
            ],
            out_specs=pl.BlockSpec((tb, NPAD), lambda b, c: (b, 0)),
            scratch_shapes=[pltpu.VMEM((tb, N1), jnp.float32)],
        )
        kernel = _pool_head_streamed_kernel
        dims = ("parallel", "arbitrary")

    out = pl.pallas_call(
        kernel,
        out_shape=jax.ShapeDtypeStruct((Bp, NPAD), jnp.float32),
        grid_spec=grid_spec,
        compiler_params=pltpu.CompilerParams(
            dimension_semantics=dims, vmem_limit_bytes=vmem_limit),
    )(x, params["w1_max"], params["w1_avg"], params["b1"],
      params["w2"], params["b2"], params["w3"], params["b3"])
    return out[:B, :n_out]


def nchw_to_nhwc(feat_map, dtype=jnp.bfloat16):
    # TODO(synk): in production the (external) resnet backbone should emit NHWC bf16
    # directly (native TPU conv layout) so this adapter disappears; here it at least
    # fuses the bf16 cast into the single transpose op.
    return jnp.transpose(feat_map, (0, 2, 3, 1)).astype(dtype)


# -----------------------------------------------------------------------------
# Parameter construction.
#   Raw params mirror the PyTorch module (eval mode): BN -> affine scale/shift,
#   Dropout -> identity, Linear weights stored transposed for x @ W.
#   fold_head_params folds the BN affines into the Linear weights/biases, splits W1
#   into max/avg halves, folds the 1/HW average-pool scale into the avg half, pads
#   the final Linear to a 128-lane output, and casts weights to bf16.
# -----------------------------------------------------------------------------
def _linear_params(key, fan_in, fan_out):
    kw, kb = jax.random.split(key)
    bound = fan_in ** -0.5
    w = jax.random.uniform(kw, (fan_in, fan_out), jnp.float32, -bound, bound)
    b = jax.random.uniform(kb, (fan_out,), jnp.float32, -bound, bound)
    return w, b


def _bn_affine(key, dim, eps=1e-5):
    # Eval-mode BatchNorm1d folded to y = x * scale + shift (non-trivial running stats).
    kg, kb, km, kv = jax.random.split(key, 4)
    gamma = 1.0 + 0.1 * jax.random.normal(kg, (dim,), jnp.float32)
    beta = 0.1 * jax.random.normal(kb, (dim,), jnp.float32)
    mean = 0.1 * jax.random.normal(km, (dim,), jnp.float32)
    var = jnp.abs(1.0 + 0.1 * jax.random.normal(kv, (dim,), jnp.float32))
    scale = gamma / jnp.sqrt(var + eps)
    shift = beta - mean * scale
    return scale, shift


def make_raw_head_params(key, in_features, clazz):
    kb1, kl1, kb2, kl2, kb3, kl3 = jax.random.split(key, 6)
    f2, f4 = in_features // 2, in_features // 4
    p = {}
    p["s1"], p["t1"] = _bn_affine(kb1, in_features)
    p["w1"], p["b1"] = _linear_params(kl1, in_features, f2)
    p["s2"], p["t2"] = _bn_affine(kb2, f2)
    p["w2"], p["b2"] = _linear_params(kl2, f2, f4)
    p["s3"], p["t3"] = _bn_affine(kb3, f4)
    p["w3"], p["b3"] = _linear_params(kl3, f4, clazz + 1)
    return p


def fold_head_params(raw, hw, weight_dtype=jnp.bfloat16):
    # (x*s + t) @ W + b  ==  x @ (s[:,None]*W) + (t @ W + b)
    w1 = raw["w1"] * raw["s1"][:, None]
    b1 = raw["t1"] @ raw["w1"] + raw["b1"]
    w2 = raw["w2"] * raw["s2"][:, None]
    b2 = raw["t2"] @ raw["w2"] + raw["b2"]
    w3 = raw["w3"] * raw["s3"][:, None]
    b3 = raw["t3"] @ raw["w3"] + raw["b3"]

    C = w1.shape[0] // 2              # pooled layout is [max(0:C) ++ avg(C:2C)]
    n_out = w3.shape[1]
    n_pad = ((n_out + 127) // 128) * 128
    w3p = jnp.zeros((w3.shape[0], n_pad), jnp.float32).at[:, :n_out].set(w3)
    b3p = jnp.zeros((n_pad,), jnp.float32).at[:n_out].set(b3)

    return {
        "w1_max": w1[:C].astype(weight_dtype),
        # Fold the average-pool 1/HW scale into the avg half so the kernel only sums.
        "w1_avg": (w1[C:] * (1.0 / hw)).astype(weight_dtype),
        "b1": b1.reshape(1, -1).astype(jnp.float32),
        "w2": w2.astype(weight_dtype),
        "b2": b2.reshape(1, -1).astype(jnp.float32),
        "w3": w3p.astype(weight_dtype),
        "b3": b3p.reshape(1, -1).astype(jnp.float32),
    }


# -----------------------------------------------------------------------------
# Pure-JAX references.
# -----------------------------------------------------------------------------
def reference_module(feat_map_nchw, raw):
    """Unfolded f32 math exactly as the PyTorch module (eval mode) computes it."""
    B, C, H, W = feat_map_nchw.shape
    x = feat_map_nchw.reshape(B, C, H * W)
    pooled = jnp.concatenate([x.max(-1), x.mean(-1)], axis=1)
    h = pooled * raw["s1"] + raw["t1"]
    h = jnp.maximum(h @ raw["w1"] + raw["b1"], 0.0)
    h = h * raw["s2"] + raw["t2"]
    h = jnp.maximum(h @ raw["w2"] + raw["b2"], 0.0)
    h = h * raw["s3"] + raw["t3"]
    return h @ raw["w3"] + raw["b3"]


def reference_folded(feat_nhwc, params, n_out):
    """Mirrors the kernel's folded / mixed-precision math on NHWC features."""
    B, H, W, C = feat_nhwc.shape
    x = feat_nhwc.reshape(B, H * W, C)
    mx = jnp.max(x, axis=1).astype(params["w1_max"].dtype)
    sm = jnp.sum(x, axis=1, dtype=jnp.float32).astype(params["w1_avg"].dtype)
    h = (jnp.dot(mx, params["w1_max"], preferred_element_type=jnp.float32)
         + jnp.dot(sm, params["w1_avg"], preferred_element_type=jnp.float32)
         + params["b1"])
    h = jnp.maximum(h, 0.0).astype(params["w2"].dtype)
    h = jnp.dot(h, params["w2"], preferred_element_type=jnp.float32) + params["b2"]
    h = jnp.maximum(h, 0.0).astype(params["w3"].dtype)
    y = jnp.dot(h, params["w3"], preferred_element_type=jnp.float32) + params["b3"]
    return y[:, :n_out]


if __name__ == "__main__":
    key = jax.random.PRNGKey(0)
    k_x, k_p = jax.random.split(key)

    # Small synthetic "layer4" feature map.
    B, C, H, W = 8, 256, 4, 4
    clazz = 6
    n_out = clazz + 1
    in_features = C * 1 * 1 * 2           # AdaptiveConcatPool2d(1) doubles channels

    feat_map = jax.random.normal(k_x, (B, C, H, W), jnp.float32)      # NCHW, as in torch
    raw = make_raw_head_params(k_p, in_features, clazz)

    # 1) f32 folded weights + f32 NHWC features: kernel must match the unfolded module
    #    reference tightly (validates pool+head fusion and the BN/avg-scale folding).
    params_f32 = fold_head_params(raw, hw=H * W, weight_dtype=jnp.float32)
    feat_f32 = nchw_to_nhwc(feat_map, dtype=jnp.float32)
    out_f32 = jax.block_until_ready(
        residual_flower_forward(feat_f32, params_f32, n_out=n_out))
    ref_mod = reference_module(feat_map, raw)
    assert out_f32.shape == (B, n_out), out_f32.shape
    assert jnp.allclose(out_f32, ref_mod, atol=2e-3, rtol=2e-3), \
        "f32 kernel mismatch vs module reference"

    # 2) Deployment config: bf16 weights + bf16 NHWC features, W1-resident path.
    params_bf16 = fold_head_params(raw, hw=H * W, weight_dtype=jnp.bfloat16)
    feat_bf16 = nchw_to_nhwc(feat_map, dtype=jnp.bfloat16)
    out_bf16 = jax.block_until_ready(
        residual_flower_forward(feat_bf16, params_bf16, n_out=n_out))
    ref_fold = reference_folded(feat_bf16, params_bf16, n_out)
    assert out_bf16.shape == (B, n_out), out_bf16.shape
    assert jnp.allclose(out_bf16, ref_fold, atol=2e-3, rtol=2e-3), \
        "bf16 kernel mismatch vs folded reference (resident path)"

    # 3) Force the channel-streamed (K-reduction + accumulator) path and re-check.
    out_stream = jax.block_until_ready(
        residual_flower_forward(feat_bf16, params_bf16, n_out=n_out, force_stream=True))
    assert jnp.allclose(out_stream, ref_fold, atol=2e-3, rtol=2e-3), \
        "bf16 kernel mismatch vs folded reference (streamed path)"

    print("KERNEL_OK")
</pallas_src>

<mosaic_0001>
module attributes {stable_mosaic.version = 11 : i64} {
  func.func @_pool_head_resident_kernel(%arg0: i32, %arg1: memref<8x16x256xf32, #tpu.memory_space<vmem>>, %arg2: memref<256x256xf32, #tpu.memory_space<vmem>>, %arg3: memref<256x256xf32, #tpu.memory_space<vmem>>, %arg4: memref<1x256xf32, #tpu.memory_space<vmem>>, %arg5: memref<256x128xf32, #tpu.memory_space<vmem>>, %arg6: memref<1x128xf32, #tpu.memory_space<vmem>>, %arg7: memref<128x128xf32, #tpu.memory_space<vmem>>, %arg8: memref<1x128xf32, #tpu.memory_space<vmem>>, %arg9: memref<8x128xf32, #tpu.memory_space<vmem>>) attributes {dimension_semantics = [#tpu.dimension_semantics<parallel>], iteration_bounds = array<i64: 1>, scalar_prefetch = 0 : i64, scratch_operands = 0 : i64, tpu.core_type = #tpu.core_type<tc>, window_params = [{transform_indices = @transform_0, window_bounds = array<i64: 8, 16, 256>}, {pipeline_mode = #tpu.pipeline_mode<synchronous>, transform_indices = @transform_1, window_bounds = array<i64: 256, 256>}, {pipeline_mode = #tpu.pipeline_mode<synchronous>, transform_indices = @transform_2, window_bounds = array<i64: 256, 256>}, {pipeline_mode = #tpu.pipeline_mode<synchronous>, transform_indices = @transform_3, window_bounds = array<i64: 1, 256>}, {pipeline_mode = #tpu.pipeline_mode<synchronous>, transform_indices = @transform_4, window_bounds = array<i64: 256, 128>}, {pipeline_mode = #tpu.pipeline_mode<synchronous>, transform_indices = @transform_5, window_bounds = array<i64: 1, 128>}, {pipeline_mode = #tpu.pipeline_mode<synchronous>, transform_indices = @transform_6, window_bounds = array<i64: 128, 128>}, {pipeline_mode = #tpu.pipeline_mode<synchronous>, transform_indices = @transform_7, window_bounds = array<i64: 1, 128>}, {transform_indices = @transform_8, window_bounds = array<i64: 8, 128>}]} {
    %c0 = arith.constant 0 : index
    %c0_0 = arith.constant 0 : index
    %c0_1 = arith.constant 0 : index
    %0 = vector.load %arg1[%c0, %c0_0, %c0_1] : memref<8x16x256xf32, #tpu.memory_space<vmem>>, vector<8x16x256xf32>
    %cst = arith.constant dense<0xFF800000> : vector<8x256xf32>
    %1 = vector.multi_reduction <maximumf>, %0, %cst [1] : vector<8x16x256xf32> to vector<8x256xf32>
    %cst_2 = arith.constant dense<0.000000e+00> : vector<8x256xf32>
    %2 = vector.multi_reduction <add>, %0, %cst_2 [1] : vector<8x16x256xf32> to vector<8x256xf32>
    %c0_3 = arith.constant 0 : index
    %c0_4 = arith.constant 0 : index
    %3 = vector.load %arg2[%c0_3, %c0_4] : memref<256x256xf32, #tpu.memory_space<vmem>>, vector<256x256xf32>
    %cst_5 = arith.constant dense<0.000000e+00> : vector<8x256xf32>
    %4 = tpu.matmul %1, %3, %cst_5 {dimension_numbers = #tpu.dot_dimension_numbers<[1], [0], [0], [1], [0, 0, 1, 1], [], []>} : vector<8x256xf32>, vector<256x256xf32>, vector<8x256xf32> -> vector<8x256xf32>
    %c0_6 = arith.constant 0 : index
    %c0_7 = arith.constant 0 : index
    %5 = vector.load %arg3[%c0_6, %c0_7] : memref<256x256xf32, #tpu.memory_space<vmem>>, vector<256x256xf32>
    %cst_8 = arith.constant dense<0.000000e+00> : vector<8x256xf32>
    %6 = tpu.matmul %2, %5, %cst_8 {dimension_numbers = #tpu.dot_dimension_numbers<[1], [0], [0], [1], [0, 0, 1, 1], [], []>} : vector<8x256xf32>, vector<256x256xf32>, vector<8x256xf32> -> vector<8x256xf32>
    %7 = arith.addf %4, %6 : vector<8x256xf32>
    %c0_9 = arith.constant 0 : index
    %c0_10 = arith.constant 0 : index
    %8 = vector.load %arg4[%c0_9, %c0_10] : memref<1x256xf32, #tpu.memory_space<vmem>>, vector<1x256xf32>
    %9 = vector.broadcast %8 : vector<1x256xf32> to vector<8x256xf32>
    %10 = arith.addf %7, %9 : vector<8x256xf32>
    %cst_11 = arith.constant 0.000000e+00 : f32
    %11 = vector.broadcast %cst_11 : f32 to vector<8x256xf32>
    %12 = arith.maximumf %10, %11 : vector<8x256xf32>
    %c0_12 = arith.constant 0 : index
    %c0_13 = arith.constant 0 : index
    %13 = vector.load %arg5[%c0_12, %c0_13] : memref<256x128xf32, #tpu.memory_space<vmem>>, vector<256x128xf32>
    %cst_14 = arith.constant dense<0.000000e+00> : vector<8x128xf32>
    %14 = tpu.matmul %12, %13, %cst_14 {dimension_numbers = #tpu.dot_dimension_numbers<[1], [0], [0], [1], [0, 0, 1, 1], [], []>} : vector<8x256xf32>, vector<256x128xf32>, vector<8x128xf32> -> vector<8x128xf32>
    %c0_15 = arith.constant 0 : index
    %c0_16 = arith.constant 0 : index
    %15 = vector.load %arg6[%c0_15, %c0_16] : memref<1x128xf32, #tpu.memory_space<vmem>>, vector<1x128xf32>
    %16 = vector.broadcast %15 : vector<1x128xf32> to vector<8x128xf32>
    %17 = arith.addf %14, %16 : vector<8x128xf32>
    %cst_17 = arith.constant 0.000000e+00 : f32
    %18 = vector.broadcast %cst_17 : f32 to vector<8x128xf32>
    %19 = arith.maximumf %17, %18 : vector<8x128xf32>
    %c0_18 = arith.constant 0 : index
    %c0_19 = arith.constant 0 : index
    %20 = vector.load %arg7[%c0_18, %c0_19] : memref<128x128xf32, #tpu.memory_space<vmem>>, vector<128x128xf32>
    %cst_20 = arith.constant dense<0.000000e+00> : vector<8x128xf32>
    %21 = tpu.matmul %19, %20, %cst_20 {dimension_numbers = #tpu.dot_dimension_numbers<[1], [0], [0], [1], [0, 0, 1, 1], [], []>} : vector<8x128xf32>, vector<128x128xf32>, vector<8x128xf32> -> vector<8x128xf32>
    %c0_21 = arith.constant 0 : index
    %c0_22 = arith.constant 0 : index
    %22 = vector.load %arg8[%c0_21, %c0_22] : memref<1x128xf32, #tpu.memory_space<vmem>>, vector<1x128xf32>
    %23 = vector.broadcast %22 : vector<1x128xf32> to vector<8x128xf32>
    %24 = arith.addf %21, %23 : vector<8x128xf32>
    %c0_23 = arith.constant 0 : index
    %c0_24 = arith.constant 0 : index
    %25 = vector.load %arg9[%c0_23, %c0_24] : memref<8x128xf32, #tpu.memory_space<vmem>>, vector<8x128xf32>
    tpu.vector_store %arg9[%c0_23, %c0_24], %24 {strides = array<i32>} : memref<8x128xf32, #tpu.memory_space<vmem>>, vector<8x128xf32>,
    return
  }
  func.func @transform_0(%arg0: i32) -> (i32, i32, i32) {
    %c0_i32 = arith.constant 0 : i32
    %c0_i32_0 = arith.constant 0 : i32
    %c0_i32_1 = arith.constant 0 : i32
    return %arg0, %c0_i32, %c0_i32_0 : i32, i32, i32
  }
  func.func @transform_1(%arg0: i32) -> (i32, i32) {
    %c0_i32 = arith.constant 0 : i32
    %c0_i32_0 = arith.constant 0 : i32
    %c0_i32_1 = arith.constant 0 : i32
    return %c0_i32, %c0_i32_0 : i32, i32
  }
  func.func @transform_2(%arg0: i32) -> (i32, i32) {
    %c0_i32 = arith.constant 0 : i32
    %c0_i32_0 = arith.constant 0 : i32
    %c0_i32_1 = arith.constant 0 : i32
    return %c0_i32, %c0_i32_0 : i32, i32
  }
  func.func @transform_3(%arg0: i32) -> (i32, i32) {
    %c0_i32 = arith.constant 0 : i32
    %c0_i32_0 = arith.constant 0 : i32
    %c0_i32_1 = arith.constant 0 : i32
    return %c0_i32, %c0_i32_0 : i32, i32
  }
  func.func @transform_4(%arg0: i32) -> (i32, i32) {
    %c0_i32 = arith.constant 0 : i32
    %c0_i32_0 = arith.constant 0 : i32
    %c0_i32_1 = arith.constant 0 : i32
    return %c0_i32, %c0_i32_0 : i32, i32
  }
  func.func @transform_5(%arg0: i32) -> (i32, i32) {
    %c0_i32 = arith.constant 0 : i32
    %c0_i32_0 = arith.constant 0 : i32
    %c0_i32_1 = arith.constant 0 : i32
    return %c0_i32, %c0_i32_0 : i32, i32
  }
  func.func @transform_6(%arg0: i32) -> (i32, i32) {
    %c0_i32 = arith.constant 0 : i32
    %c0_i32_0 = arith.constant 0 : i32
    %c0_i32_1 = arith.constant 0 : i32
    return %c0_i32, %c0_i32_0 : i32, i32
  }
  func.func @transform_7(%arg0: i32) -> (i32, i32) {
    %c0_i32 = arith.constant 0 : i32
    %c0_i32_0 = arith.constant 0 : i32
    %c0_i32_1 = arith.constant 0 : i32
    return %c0_i32, %c0_i32_0 : i32, i32
  }
  func.func @transform_8(%arg0: i32) -> (i32, i32) {
    %c0_i32 = arith.constant 0 : i32
    %c0_i32_0 = arith.constant 0 : i32
    return %arg0, %c0_i32 : i32, i32
  }
}

</mosaic_0001>

<llo_original>
// kernel: residual_flower_forward.1
$region0: #{residual_flower_forward.1}
  #allocation0 [shape = 'u32[]', space=smem, size = 0x4, offset = 0x4, fixed_abs, tag = 'smem constant byte address 0x4 - core index']
  #allocation1 [shape = 'u32[144,128]{1,0:T(1,128)}', space=vmem, size = 0x12000, scoped, tag = 'internal scratch']
  %s0 = inlined_call_operand.vmem [shape: f32[8,16,256], index: 0, kind: input, shape index: {}]
  %s1 = inlined_call_operand.vmem [shape: f32[256,256], index: 1, kind: input, shape index: {}]
  %s2 = inlined_call_operand.hbm [shape: f32[256,256], index: 2, kind: input, shape index: {}]
  %s3 = inlined_call_operand.vmem [shape: f32[1,256], index: 3, kind: input, shape index: {}]
  %s4 = inlined_call_operand.hbm [shape: f32[256,128], index: 4, kind: input, shape index: {}]
  %s5 = inlined_call_operand.vmem [shape: f32[1,128], index: 5, kind: input, shape index: {}]
  %s6 = inlined_call_operand.hbm [shape: f32[128,128], index: 6, kind: input, shape index: {}]
  %s7 = inlined_call_operand.vmem [shape: f32[1,128], index: 7, kind: input, shape index: {}]
  %s8 = inlined_call_operand.hbm [shape: f32[8,128], index: 8, kind: output, shape index: {}]
  %s9 = sld [smem:[#allocation0]]
  $region54: #{residual_flower_forward.1} parent=0
    _
  %s11 = ssub.s32 1, %s9
  %s12 = scalar_select 0, %s11, %s9
  $region1: #{residual_flower_forward.1} parent=0
    #allocation2 [shape = 'u8[262144]{0}', space=vmem, size = 0x40000, scoped, tag = 'input window, operand 2, single buffered']
    #allocation3 [shape = 's32[1]{0}', space=sflag, size = 0x4, scoped, tag = 'scoped memory for residual_flower_forward.1']
    #allocation4 [shape = 's32[1]{0}', space=sflag, size = 0x4, scoped, tag = 'scoped memory for residual_flower_forward.1']
    #allocation5 [shape = 'u8[131072]{0}', space=vmem, size = 0x20000, scoped, tag = 'input window, operand 4, single buffered']
    #allocation6 [shape = 's32[1]{0}', space=sflag, size = 0x4, scoped, tag = 'scoped memory for residual_flower_forward.1']
    #allocation7 [shape = 'u8[65536]{0}', space=vmem, size = 0x10000, scoped, tag = 'input window, operand 6, single buffered']
    #allocation8 [shape = 'u8[4096]{0}', space=vmem, size = 0x1000, scoped, tag = 'output window, operand 0, single buffered']
    %13 = vsyncpa [#allocation3], 0
    %14 = vsyncpa [#allocation6], 0
    %15 = vsyncpa [#allocation4], 0
    // Predicated region
    $region2: #{residual_flower_forward.1} parent=1 // pred_check
      _
    $region3: #{residual_flower_forward.1} parent=1 // pred_check_branch
      %17 = sbr.rel (0) target = $region5
    $region4: #{residual_flower_forward.1} parent=1 // pred_region
      _
    $region5: #{residual_flower_forward.1} parent=1 // pred_fallthru
      _
    // Predicated region
    $region6: #{residual_flower_forward.1} parent=1 // pred_check
      _
    $region7: #{residual_flower_forward.1} parent=1 // pred_check_branch
      %19 = sbr.rel (0) target = $region9
    $region8: #{residual_flower_forward.1} parent=1 // pred_region
      _
    $region9: #{residual_flower_forward.1} parent=1 // pred_fallthru
      _
    // Predicated region
    $region10: #{residual_flower_forward.1} parent=1 // pred_check
      _
    $region11: #{residual_flower_forward.1} parent=1 // pred_check_branch
      %21 = sbr.rel (0) target = $region13
    $region12: #{residual_flower_forward.1} parent=1 // pred_region
      %s23 = ssub.s32 8192, 8192
      %24 = vsyncadd [#allocation3], %s23
      %s25 = sshll.u32 [#allocation2], 4
      %s26 = int_to_ptr.vmem [resolvable:$true] %s25
      %31 = dma.hbm_to_vmem [thread:$0]  %s2, 8192, %s26, [#allocation3], 256, 256, 16
    $region13: #{residual_flower_forward.1} parent=1 // pred_fallthru
      _
    // Predicated region
    $region14: #{residual_flower_forward.1} parent=1 // pred_check
      _
    $region15: #{residual_flower_forward.1} parent=1 // pred_check_branch
      %33 = sbr.rel (0) target = $region17
    $region16: #{residual_flower_forward.1} parent=1 // pred_region
      _
    $region17: #{residual_flower_forward.1} parent=1 // pred_fallthru
      _
    // Predicated region
    $region18: #{residual_flower_forward.1} parent=1 // pred_check
      _
    $region19: #{residual_flower_forward.1} parent=1 // pred_check_branch
      %35 = sbr.rel (0) target = $region21
    $region20: #{residual_flower_forward.1} parent=1 // pred_region
      %s37 = ssub.s32 4096, 4096
      %38 = vsyncadd [#allocation6], %s37
      %s39 = sshll.u32 [#allocation5], 4
      %s40 = int_to_ptr.vmem [resolvable:$true] %s39
      %45 = dma.hbm_to_vmem [thread:$0]  %s4, 4096, %s40, [#allocation6], 128, 128, 8
    $region21: #{residual_flower_forward.1} parent=1 // pred_fallthru
      _
    // Predicated region
    $region22: #{residual_flower_forward.1} parent=1 // pred_check
      _
    $region23: #{residual_flower_forward.1} parent=1 // pred_check_branch
      %47 = sbr.rel (0) target = $region25
    $region24: #{residual_flower_forward.1} parent=1 // pred_region
      _
    $region25: #{residual_flower_forward.1} parent=1 // pred_fallthru
      _
    // Predicated region
    $region26: #{residual_flower_forward.1} parent=1 // pred_check
      _
    $region27: #{residual_flower_forward.1} parent=1 // pred_check_branch
      %49 = sbr.rel (0) target = $region29
    $region28: #{residual_flower_forward.1} parent=1 // pred_region
      %s51 = ssub.s32 2048, 2048
      %52 = vsyncadd [#allocation6], %s51
      %s53 = sshll.u32 [#allocation7], 4
      %s54 = int_to_ptr.vmem [resolvable:$true] %s53
      %59 = dma.hbm_to_vmem [thread:$0]  %s6, 2048, %s54, [#allocation6], 128, 128, 8
    $region29: #{residual_flower_forward.1} parent=1 // pred_fallthru
      _
    // Predicated region
    $region30: #{residual_flower_forward.1} parent=1 // pred_check
      _
    $region31: #{residual_flower_forward.1} parent=1 // pred_check_branch
      %61 = sbr.rel (0) target = $region33
    $region32: #{residual_flower_forward.1} parent=1 // pred_region
      _
    $region33: #{residual_flower_forward.1} parent=1 // pred_fallthru
      _
    // Predicated region
    $region34: #{residual_flower_forward.1} parent=1 // pred_check
      _
    $region35: #{residual_flower_forward.1} parent=1 // pred_check_branch
      %63 = sbr.rel (0) target = $region37
    $region36: #{residual_flower_forward.1} parent=1 // pred_region
      %64 = dma.done [#allocation3], 8192
    $region37: #{residual_flower_forward.1} parent=1 // pred_fallthru
      _
    // Predicated region
    $region38: #{residual_flower_forward.1} parent=1 // pred_check
      _
    $region39: #{residual_flower_forward.1} parent=1 // pred_check_branch
      %66 = sbr.rel (0) target = $region41
    $region40: #{residual_flower_forward.1} parent=1 // pred_region
      %67 = dma.done [#allocation6], 4096
    $region41: #{residual_flower_forward.1} parent=1 // pred_fallthru
      _
    // Predicated region
    $region42: #{residual_flower_forward.1} parent=1 // pred_check
      _
    $region43: #{residual_flower_forward.1} parent=1 // pred_check_branch
      %69 = sbr.rel (0) target = $region45
    $region44: #{residual_flower_forward.1} parent=1 // pred_region
      %70 = dma.done [#allocation6], 2048
    $region45: #{residual_flower_forward.1} parent=1 // pred_fallthru
      _
    %v71 = vld [vmem:[%s0] sm:$0xff]
    %v72 = vld [vmem:[%s0 + $0x8] sm:$0xff]
    %v73 = vld [vmem:[%s0 + $0x10] sm:$0xff]
    %v74 = vld [vmem:[%s0 + $0x18] sm:$0xff]
    %v75 = vld [vmem:[%s0 + $0x20] sm:$0xff]
    %v76 = vld [vmem:[%s0 + $0x28] sm:$0xff]
    %v77 = vld [vmem:[%s0 + $0x30] sm:$0xff]
    %v78 = vld [vmem:[%s0 + $0x38] sm:$0xff]
    %v79 = vld [vmem:[%s0 + $0x40] sm:$0xff]
    %v80 = vld [vmem:[%s0 + $0x48] sm:$0xff]
    %v81 = vld [vmem:[%s0 + $0x50] sm:$0xff]
    %v82 = vld [vmem:[%s0 + $0x58] sm:$0xff]
    %v83 = vld [vmem:[%s0 + $0x60] sm:$0xff]
    %v84 = vld [vmem:[%s0 + $0x68] sm:$0xff]
    %v85 = vld [vmem:[%s0 + $0x70] sm:$0xff]
    %v86 = vld [vmem:[%s0 + $0x78] sm:$0xff]
    %v87 = vld [vmem:[%s0 + $0x80] sm:$0xff]
    %v88 = vld [vmem:[%s0 + $0x88] sm:$0xff]
    %v89 = vld [vmem:[%s0 + $0x90] sm:$0xff]
    %v90 = vld [vmem:[%s0 + $0x98] sm:$0xff]
    %v91 = vld [vmem:[%s0 + $0xa0] sm:$0xff]
    %v92 = vld [vmem:[%s0 + $0xa8] sm:$0xff]
    %v93 = vld [vmem:[%s0 + $0xb0] sm:$0xff]
    %v94 = vld [vmem:[%s0 + $0xb8] sm:$0xff]
    %v95 = vld [vmem:[%s0 + $0xc0] sm:$0xff]
    %v96 = vld [vmem:[%s0 + $0xc8] sm:$0xff]
    %v97 = vld [vmem:[%s0 + $0xd0] sm:$0xff]
    %v98 = vld [vmem:[%s0 + $0xd8] sm:$0xff]
    %v99 = vld [vmem:[%s0 + $0xe0] sm:$0xff]
    %v100 = vld [vmem:[%s0 + $0xe8] sm:$0xff]
    %v101 = vld [vmem:[%s0 + $0xf0] sm:$0xff]
    %v102 = vld [vmem:[%s0 + $0xf8] sm:$0xff]
    %v103 = vmax.f32 %v71, %v73
    %v104 = vrot.slane %v103, 4
    %v105 = vmax.f32 %v103, %v104
    %v106 = vrot.slane %v105, 2
    %v107 = vmax.f32 %v105, %v106
    %v108 = vrot.slane %v107, 1
    %v109 = vmax.f32 %v107, %v108
    %v110 = vmax.f32 %v72, %v74
    %v111 = vrot.slane %v110, 4
    %v112 = vmax.f32 %v110, %v111
    %v113 = vrot.slane %v112, 2
    %v114 = vmax.f32 %v112, %v113
    %v115 = vrot.slane %v114, 1
    %v116 = vmax.f32 %v114, %v115
    %v117 = vmax.f32 %v75, %v77
    %v118 = vrot.slane %v117, 4
    %v119 = vmax.f32 %v117, %v118
    %v120 = vrot.slane %v119, 2
    %v121 = vmax.f32 %v119, %v120
    %v122 = vrot.slane %v121, 1
    %v123 = vmax.f32 %v121, %v122
    %v124 = vmax.f32 %v76, %v78
    %v125 = vrot.slane %v124, 4
    %v126 = vmax.f32 %v124, %v125
    %v127 = vrot.slane %v126, 2
    %v128 = vmax.f32 %v126, %v127
    %v129 = vrot.slane %v128, 1
    %v130 = vmax.f32 %v128, %v129
    %v131 = vmax.f32 %v79, %v81
    %v132 = vrot.slane %v131, 4
    %v133 = vmax.f32 %v131, %v132
    %v134 = vrot.slane %v133, 2
    %v135 = vmax.f32 %v133, %v134
    %v136 = vrot.slane %v135, 1
    %v137 = vmax.f32 %v135, %v136
    %v138 = vmax.f32 %v80, %v82
    %v139 = vrot.slane %v138, 4
    %v140 = vmax.f32 %v138, %v139
    %v141 = vrot.slane %v140, 2
    %v142 = vmax.f32 %v140, %v141
    %v143 = vrot.slane %v142, 1
    %v144 = vmax.f32 %v142, %v143
    %v145 = vmax.f32 %v83, %v85
    %v146 = vrot.slane %v145, 4
    %v147 = vmax.f32 %v145, %v146
    %v148 = vrot.slane %v147, 2
    %v149 = vmax.f32 %v147, %v148
    %v150 = vrot.slane %v149, 1
    %v151 = vmax.f32 %v149, %v150
    %v152 = vmax.f32 %v84, %v86
    %v153 = vrot.slane %v152, 4
    %v154 = vmax.f32 %v152, %v153
    %v155 = vrot.slane %v154, 2
    %v156 = vmax.f32 %v154, %v155
    %v157 = vrot.slane %v156, 1
    %v158 = vmax.f32 %v156, %v157
    %v159 = vmax.f32 %v87, %v89
    %v160 = vrot.slane %v159, 4
    %v161 = vmax.f32 %v159, %v160
    %v162 = vrot.slane %v161, 2
    %v163 = vmax.f32 %v161, %v162
    %v164 = vrot.slane %v163, 1
    %v165 = vmax.f32 %v163, %v164
    %v166 = vmax.f32 %v88, %v90
    %v167 = vrot.slane %v166, 4
    %v168 = vmax.f32 %v166, %v167
    %v169 = vrot.slane %v168, 2
    %v170 = vmax.f32 %v168, %v169
    %v171 = vrot.slane %v170, 1
    %v172 = vmax.f32 %v170, %v171
    %v173 = vmax.f32 %v91, %v93
    %v174 = vrot.slane %v173, 4
    %v175 = vmax.f32 %v173, %v174
    %v176 = vrot.slane %v175, 2
    %v177 = vmax.f32 %v175, %v176
    %v178 = vrot.slane %v177, 1
    %v179 = vmax.f32 %v177, %v178
    %v180 = vmax.f32 %v92, %v94
    %v181 = vrot.slane %v180, 4
    %v182 = vmax.f32 %v180, %v181
    %v183 = vrot.slane %v182, 2
    %v184 = vmax.f32 %v182, %v183
    %v185 = vrot.slane %v184, 1
    %v186 = vmax.f32 %v184, %v185
    %v187 = vmax.f32 %v95, %v97
    %v188 = vrot.slane %v187, 4
    %v189 = vmax.f32 %v187, %v188
    %v190 = vrot.slane %v189, 2
    %v191 = vmax.f32 %v189, %v190
    %v192 = vrot.slane %v191, 1
    %v193 = vmax.f32 %v191, %v192
    %v194 = vmax.f32 %v96, %v98
    %v195 = vrot.slane %v194, 4
    %v196 = vmax.f32 %v194, %v195
    %v197 = vrot.slane %v196, 2
    %v198 = vmax.f32 %v196, %v197
    %v199 = vrot.slane %v198, 1
    %v200 = vmax.f32 %v198, %v199
    %v201 = vmax.f32 %v99, %v101
    %v202 = vrot.slane %v201, 4
    %v203 = vmax.f32 %v201, %v202
    %v204 = vrot.slane %v203, 2
    %v205 = vmax.f32 %v203, %v204
    %v206 = vrot.slane %v205, 1
    %v207 = vmax.f32 %v205, %v206
    %v208 = vmax.f32 %v100, %v102
    %v209 = vrot.slane %v208, 4
    %v210 = vmax.f32 %v208, %v209
    %v211 = vrot.slane %v210, 2
    %v212 = vmax.f32 %v210, %v211
    %v213 = vrot.slane %v212, 1
    %v214 = vmax.f32 %v212, %v213
    %v215 = vadd.f32 %v71, %v73
    %v216 = vrot.slane %v215, 4
    %v217 = vadd.f32 %v215, %v216
    %v218 = vrot.slane %v217, 2
    %v219 = vadd.f32 %v217, %v218
    %v220 = vrot.slane %v219, 1
    %v221 = vadd.f32 %v219, %v220
    %v222 = vadd.f32 %v72, %v74
    %v223 = vrot.slane %v222, 4
    %v224 = vadd.f32 %v222, %v223
    %v225 = vrot.slane %v224, 2
    %v226 = vadd.f32 %v224, %v225
    %v227 = vrot.slane %v226, 1
    %v228 = vadd.f32 %v226, %v227
    %v229 = vadd.f32 %v75, %v77
    %v230 = vrot.slane %v229, 4
    %v231 = vadd.f32 %v229, %v230
    %v232 = vrot.slane %v231, 2
    %v233 = vadd.f32 %v231, %v232
    %v234 = vrot.slane %v233, 1
    %v235 = vadd.f32 %v233, %v234
    %v236 = vadd.f32 %v76, %v78
    %v237 = vrot.slane %v236, 4
    %v238 = vadd.f32 %v236, %v237
    %v239 = vrot.slane %v238, 2
    %v240 = vadd.f32 %v238, %v239
    %v241 = vrot.slane %v240, 1
    %v242 = vadd.f32 %v240, %v241
    %v243 = vadd.f32 %v79, %v81
    %v244 = vrot.slane %v243, 4
    %v245 = vadd.f32 %v243, %v244
    %v246 = vrot.slane %v245, 2
    %v247 = vadd.f32 %v245, %v246
    %v248 = vrot.slane %v247, 1
    %v249 = vadd.f32 %v247, %v248
    %v250 = vadd.f32 %v80, %v82
    %v251 = vrot.slane %v250, 4
    %v252 = vadd.f32 %v250, %v251
    %v253 = vrot.slane %v252, 2
    %v254 = vadd.f32 %v252, %v253
    %v255 = vrot.slane %v254, 1
    %v256 = vadd.f32 %v254, %v255
    %v257 = vadd.f32 %v83, %v85
    %v258 = vrot.slane %v257, 4
    %v259 = vadd.f32 %v257, %v258
    %v260 = vrot.slane %v259, 2
    %v261 = vadd.f32 %v259, %v260
    %v262 = vrot.slane %v261, 1
    %v263 = vadd.f32 %v261, %v262
    %v264 = vadd.f32 %v84, %v86
    %v265 = vrot.slane %v264, 4
    %v266 = vadd.f32 %v264, %v265
    %v267 = vrot.slane %v266, 2
    %v268 = vadd.f32 %v266, %v267
    %v269 = vrot.slane %v268, 1
    %v270 = vadd.f32 %v268, %v269
    %v271 = vadd.f32 %v87, %v89
    %v272 = vrot.slane %v271, 4
    %v273 = vadd.f32 %v271, %v272
    %v274 = vrot.slane %v273, 2
    %v275 = vadd.f32 %v273, %v274
    %v276 = vrot.slane %v275, 1
    %v277 = vadd.f32 %v275, %v276
    %v278 = vadd.f32 %v88, %v90
    %v279 = vrot.slane %v278, 4
    %v280 = vadd.f32 %v278, %v279
    %v281 = vrot.slane %v280, 2
    %v282 = vadd.f32 %v280, %v281
    %v283 = vrot.slane %v282, 1
    %v284 = vadd.f32 %v282, %v283
    %v285 = vadd.f32 %v91, %v93
    %v286 = vrot.slane %v285, 4
    %v287 = vadd.f32 %v285, %v286
    %v288 = vrot.slane %v287, 2
    %v289 = vadd.f32 %v287, %v288
    %v290 = vrot.slane %v289, 1
    %v291 = vadd.f32 %v289, %v290
    %v292 = vadd.f32 %v92, %v94
    %v293 = vrot.slane %v292, 4
    %v294 = vadd.f32 %v292, %v293
    %v295 = vrot.slane %v294, 2
    %v296 = vadd.f32 %v294, %v295
    %v297 = vrot.slane %v296, 1
    %v298 = vadd.f32 %v296, %v297
    %v299 = vadd.f32 %v95, %v97
    %v300 = vrot.slane %v299, 4
    %v301 = vadd.f32 %v299, %v300
    %v302 = vrot.slane %v301, 2
    %v303 = vadd.f32 %v301, %v302
    %v304 = vrot.slane %v303, 1
    %v305 = vadd.f32 %v303, %v304
    %v306 = vadd.f32 %v96, %v98
    %v307 = vrot.slane %v306, 4
    %v308 = vadd.f32 %v306, %v307
    %v309 = vrot.slane %v308, 2
    %v310 = vadd.f32 %v308, %v309
    %v311 = vrot.slane %v310, 1
    %v312 = vadd.f32 %v310, %v311
    %v313 = vadd.f32 %v99, %v101
    %v314 = vrot.slane %v313, 4
    %v315 = vadd.f32 %v313, %v314
    %v316 = vrot.slane %v315, 2
    %v317 = vadd.f32 %v315, %v316
    %v318 = vrot.slane %v317, 1
    %v319 = vadd.f32 %v317, %v318
    %v320 = vadd.f32 %v100, %v102
    %v321 = vrot.slane %v320, 4
    %v322 = vadd.f32 %v320, %v321
    %v323 = vrot.slane %v322, 2
    %v324 = vadd.f32 %v322, %v323
    %v325 = vrot.slane %v324, 1
    %v326 = vadd.f32 %v324, %v325
    %v327 = vld [vmem:[%s1] sm:$0xff]
    %v328 = vld [vmem:[%s1 + $0x8] sm:$0xff]
    %v329 = vld [vmem:[%s1 + $0x10] sm:$0xff]
    %v330 = vld [vmem:[%s1 + $0x18] sm:$0xff]
    %v331 = vld [vmem:[%s1 + $0x20] sm:$0xff]
    %v332 = vld [vmem:[%s1 + $0x28] sm:$0xff]
    %v333 = vld [vmem:[%s1 + $0x30] sm:$0xff]
    %v334 = vld [vmem:[%s1 + $0x38] sm:$0xff]
    %v335 = vld [vmem:[%s1 + $0x40] sm:$0xff]
    %v336 = vld [vmem:[%s1 + $0x48] sm:$0xff]
    %v337 = vld [vmem:[%s1 + $0x50] sm:$0xff]
    %v338 = vld [vmem:[%s1 + $0x58] sm:$0xff]
    %v339 = vld [vmem:[%s1 + $0x60] sm:$0xff]
    %v340 = vld [vmem:[%s1 + $0x68] sm:$0xff]
    %v341 = vld [vmem:[%s1 + $0x70] sm:$0xff]
    %v342 = vld [vmem:[%s1 + $0x78] sm:$0xff]
    %v343 = vld [vmem:[%s1 + $0x80] sm:$0xff]
    %v344 = vld [vmem:[%s1 + $0x88] sm:$0xff]
    %v345 = vld [vmem:[%s1 + $0x90] sm:$0xff]
    %v346 = vld [vmem:[%s1 + $0x98] sm:$0xff]
    %v347 = vld [vmem:[%s1 + $0xa0] sm:$0xff]
    %v348 = vld [vmem:[%s1 + $0xa8] sm:$0xff]
    %v349 = vld [vmem:[%s1 + $0xb0] sm:$0xff]
    %v350 = vld [vmem:[%s1 + $0xb8] sm:$0xff]
    %v351 = vld [vmem:[%s1 + $0xc0] sm:$0xff]
    %v352 = vld [vmem:[%s1 + $0xc8] sm:$0xff]
    %v353 = vld [vmem:[%s1 + $0xd0] sm:$0xff]
    %v354 = vld [vmem:[%s1 + $0xd8] sm:$0xff]
    %v355 = vld [vmem:[%s1 + $0xe0] sm:$0xff]
    %v356 = vld [vmem:[%s1 + $0xe8] sm:$0xff]
    %v357 = vld [vmem:[%s1 + $0xf0] sm:$0xff]
    %v358 = vld [vmem:[%s1 + $0xf8] sm:$0xff]
    %v359 = vld [vmem:[%s1 + $0x100] sm:$0xff]
    %v360 = vld [vmem:[%s1 + $0x108] sm:$0xff]
    %v361 = vld [vmem:[%s1 + $0x110] sm:$0xff]
    %v362 = vld [vmem:[%s1 + $0x118] sm:$0xff]
    %v363 = vld [vmem:[%s1 + $0x120] sm:$0xff]
    %v364 = vld [vmem:[%s1 + $0x128] sm:$0xff]
    %v365 = vld [vmem:[%s1 + $0x130] sm:$0xff]
    %v366 = vld [vmem:[%s1 + $0x138] sm:$0xff]
    %v367 = vld [vmem:[%s1 + $0x140] sm:$0xff]
    %v368 = vld [vmem:[%s1 + $0x148] sm:$0xff]
    %v369 = vld [vmem:[%s1 + $0x150] sm:$0xff]
    %v370 = vld [vmem:[%s1 + $0x158] sm:$0xff]
    %v371 = vld [vmem:[%s1 + $0x160] sm:$0xff]
    %v372 = vld [vmem:[%s1 + $0x168] sm:$0xff]
    %v373 = vld [vmem:[%s1 + $0x170] sm:$0xff]
    %v374 = vld [vmem:[%s1 + $0x178] sm:$0xff]
    %v375 = vld [vmem:[%s1 + $0x180] sm:$0xff]
    %v376 = vld [vmem:[%s1 + $0x188] sm:$0xff]
    %v377 = vld [vmem:[%s1 + $0x190] sm:$0xff]
    %v378 = vld [vmem:[%s1 + $0x198] sm:$0xff]
    %v379 = vld [vmem:[%s1 + $0x1a0] sm:$0xff]
    %v380 = vld [vmem:[%s1 + $0x1a8] sm:$0xff]
    %v381 = vld [vmem:[%s1 + $0x1b0] sm:$0xff]
    %v382 = vld [vmem:[%s1 + $0x1b8] sm:$0xff]
    %v383 = vld [vmem:[%s1 + $0x1c0] sm:$0xff]
    %v384 = vld [vmem:[%s1 + $0x1c8] sm:$0xff]
    %v385 = vld [vmem:[%s1 + $0x1d0] sm:$0xff]
    %v386 = vld [vmem:[%s1 + $0x1d8] sm:$0xff]
    %v387 = vld [vmem:[%s1 + $0x1e0] sm:$0xff]
    %v388 = vld [vmem:[%s1 + $0x1e8] sm:$0xff]
    %v389 = vld [vmem:[%s1 + $0x1f0] sm:$0xff]
    %v390 = vld [vmem:[%s1 + $0x1f8] sm:$0xff]
    %v391 = vld [vmem:[#allocation2] sm:$0xff]
    %v392 = vld [vmem:[#allocation2 + $0x8] sm:$0xff]
    %v393 = vld [vmem:[#allocation2 + $0x10] sm:$0xff]
    %v394 = vld [vmem:[#allocation2 + $0x18] sm:$0xff]
    %v395 = vld [vmem:[#allocation2 + $0x20] sm:$0xff]
    %v396 = vld [vmem:[#allocation2 + $0x28] sm:$0xff]
    %v397 = vld [vmem:[#allocation2 + $0x30] sm:$0xff]
    %v398 = vld [vmem:[#allocation2 + $0x38] sm:$0xff]
    %v399 = vld [vmem:[#allocation2 + $0x40] sm:$0xff]
    %v400 = vld [vmem:[#allocation2 + $0x48] sm:$0xff]
    %v401 = vld [vmem:[#allocation2 + $0x50] sm:$0xff]
    %v402 = vld [vmem:[#allocation2 + $0x58] sm:$0xff]
    %v403 = vld [vmem:[#allocation2 + $0x60] sm:$0xff]
    %v404 = vld [vmem:[#allocation2 + $0x68] sm:$0xff]
    %v405 = vld [vmem:[#allocation2 + $0x70] sm:$0xff]
    %v406 = vld [vmem:[#allocation2 + $0x78] sm:$0xff]
    %v407 = vld [vmem:[#allocation2 + $0x80] sm:$0xff]
    %v408 = vld [vmem:[#allocation2 + $0x88] sm:$0xff]
    %v409 = vld [vmem:[#allocation2 + $0x90] sm:$0xff]
    %v410 = vld [vmem:[#allocation2 + $0x98] sm:$0xff]
    %v411 = vld [vmem:[#allocation2 + $0xa0] sm:$0xff]
    %v412 = vld [vmem:[#allocation2 + $0xa8] sm:$0xff]
    %v413 = vld [vmem:[#allocation2 + $0xb0] sm:$0xff]
    %v414 = vld [vmem:[#allocation2 + $0xb8] sm:$0xff]
    %v415 = vld [vmem:[#allocation2 + $0xc0] sm:$0xff]
    %v416 = vld [vmem:[#allocation2 + $0xc8] sm:$0xff]
    %v417 = vld [vmem:[#allocation2 + $0xd0] sm:$0xff]
    %v418 = vld [vmem:[#allocation2 + $0xd8] sm:$0xff]
    %v419 = vld [vmem:[#allocation2 + $0xe0] sm:$0xff]
    %v420 = vld [vmem:[#allocation2 + $0xe8] sm:$0xff]
    %v421 = vld [vmem:[#allocation2 + $0xf0] sm:$0xff]
    %v422 = vld [vmem:[#allocation2 + $0xf8] sm:$0xff]
    %v423 = vld [vmem:[#allocation2 + $0x100] sm:$0xff]
    %v424 = vld [vmem:[#allocation2 + $0x108] sm:$0xff]
    %v425 = vld [vmem:[#allocation2 + $0x110] sm:$0xff]
    %v426 = vld [vmem:[#allocation2 + $0x118] sm:$0xff]
    %v427 = vld [vmem:[#allocation2 + $0x120] sm:$0xff]
    %v428 = vld [vmem:[#allocation2 + $0x128] sm:$0xff]
    %v429 = vld [vmem:[#allocation2 + $0x130] sm:$0xff]
    %v430 = vld [vmem:[#allocation2 + $0x138] sm:$0xff]
    %v431 = vld [vmem:[#allocation2 + $0x140] sm:$0xff]
    %v432 = vld [vmem:[#allocation2 + $0x148] sm:$0xff]
    %v433 = vld [vmem:[#allocation2 + $0x150] sm:$0xff]
    %v434 = vld [vmem:[#allocation2 + $0x158] sm:$0xff]
    %v435 = vld [vmem:[#allocation2 + $0x160] sm:$0xff]
    %v436 = vld [vmem:[#allocation2 + $0x168] sm:$0xff]
    %v437 = vld [vmem:[#allocation2 + $0x170] sm:$0xff]
    %v438 = vld [vmem:[#allocation2 + $0x178] sm:$0xff]
    %v439 = vld [vmem:[#allocation2 + $0x180] sm:$0xff]
    %v440 = vld [vmem:[#allocation2 + $0x188] sm:$0xff]
    %v441 = vld [vmem:[#allocation2 + $0x190] sm:$0xff]
    %v442 = vld [vmem:[#allocation2 + $0x198] sm:$0xff]
    %v443 = vld [vmem:[#allocation2 + $0x1a0] sm:$0xff]
    %v444 = vld [vmem:[#allocation2 + $0x1a8] sm:$0xff]
    %v445 = vld [vmem:[#allocation2 + $0x1b0] sm:$0xff]
    %v446 = vld [vmem:[#allocation2 + $0x1b8] sm:$0xff]
    %v447 = vld [vmem:[#allocation2 + $0x1c0] sm:$0xff]
    %v448 = vld [vmem:[#allocation2 + $0x1c8] sm:$0xff]
    %v449 = vld [vmem:[#allocation2 + $0x1d0] sm:$0xff]
    %v450 = vld [vmem:[#allocation2 + $0x1d8] sm:$0xff]
    %v451 = vld [vmem:[#allocation2 + $0x1e0] sm:$0xff]
    %v452 = vld [vmem:[#allocation2 + $0x1e8] sm:$0xff]
    %v453 = vld [vmem:[#allocation2 + $0x1f0] sm:$0xff]
    %v454 = vld [vmem:[#allocation2 + $0x1f8] sm:$0xff]
    %vm471 = vcmask 1041409
    %v472 = vsel %vm471, %v235, %v221
    %vm473 = vcmask 1042434
    %v474 = vsel %vm473, %v249, %v472
    %vm475 = vcmask 1043459
    %v476 = vsel %vm475, %v263, %v474
    %vm477 = vcmask 1044484
    %v478 = vsel %vm477, %v277, %v476
    %vm479 = vcmask 1045509
    %v480 = vsel %vm479, %v291, %v478
    %vm481 = vcmask 1046534
    %v482 = vsel %vm481, %v305, %v480
    %vm483 = vcmask 1047559
    %v484 = vsel %vm483, %v319, %v482
    %v485 = vsel %vm471, %v242, %v228
    %v486 = vsel %vm473, %v256, %v485
    %v487 = vsel %vm475, %v270, %v486
    %v488 = vsel %vm477, %v284, %v487
    %v489 = vsel %vm479, %v298, %v488
    %v490 = vsel %vm481, %v312, %v489
    %v491 = vsel %vm483, %v326, %v490
    %494 = vmatprep.subr.mxu0 %v392
    %495 = vmatpush1.msra.mxu0 %v391
    %496 = vmatprep.subr.mxu0 %v394
    %497 = vmatpush1.msra.mxu0 %v393
    %498 = vmatprep.subr.mxu0 %v396
    %499 = vmatpush1.msra.mxu0 %v395
    %500 = vmatprep.subr.mxu0 %v398
    %501 = vmatpush1.msra.mxu0 %v397
    %502 = vmatprep.subr.mxu0 %v400
    %503 = vmatpush1.msra.mxu0 %v399
    %504 = vmatprep.subr.mxu0 %v402
    %505 = vmatpush1.msra.mxu0 %v401
    %506 = vmatprep.subr.mxu0 %v404
    %507 = vmatpush1.msra.mxu0 %v403
    %508 = vmatprep.subr.mxu0 %v406
    %509 = vmatpush1.msra.mxu0 %v405
    %510 = vmatprep.subr.mxu0 %v408
    %511 = vmatpush1.msra.mxu0 %v407
    %512 = vmatprep.subr.mxu0 %v410
    %513 = vmatpush1.msra.mxu0 %v409
    %514 = vmatprep.subr.mxu0 %v412
    %515 = vmatpush1.msra.mxu0 %v411
    %516 = vmatprep.subr.mxu0 %v414
    %517 = vmatpush1.msra.mxu0 %v413
    %518 = vmatprep.subr.mxu0 %v416
    %519 = vmatpush1.msra.mxu0 %v415
    %520 = vmatprep.subr.mxu0 %v418
    %521 = vmatpush1.msra.mxu0 %v417
    %522 = vmatprep.subr.mxu0 %v420
    %523 = vmatpush1.msra.mxu0 %v419
    %524 = vmatprep.subr.mxu0 %v422
    %525 = vmatpush1.msra.mxu0 %v421
    %526 = vmatprep.subr.mxu0 %v424
    %527 = vmatpush1.msra.mxu0 %v423
    %528 = vmatprep.subr.mxu0 %v426
    %529 = vmatpush1.msra.mxu0 %v425
    %530 = vmatprep.subr.mxu0 %v428
    %531 = vmatpush1.msra.mxu0 %v427
    %532 = vmatprep.subr.mxu0 %v430
    %533 = vmatpush1.msra.mxu0 %v429
    %534 = vmatprep.subr.mxu0 %v432
    %535 = vmatpush1.msra.mxu0 %v431
    %536 = vmatprep.subr.mxu0 %v434
    %537 = vmatpush1.msra.mxu0 %v433
    %538 = vmatprep.subr.mxu0 %v436
    %539 = vmatpush1.msra.mxu0 %v435
    %540 = vmatprep.subr.mxu0 %v438
    %541 = vmatpush1.msra.mxu0 %v437
    %542 = vmatprep.subr.mxu0 %v440
    %543 = vmatpush1.msra.mxu0 %v439
    %544 = vmatprep.subr.mxu0 %v442
    %545 = vmatpush1.msra.mxu0 %v441
    %546 = vmatprep.subr.mxu0 %v444
    %547 = vmatpush1.msra.mxu0 %v443
    %548 = vmatprep.subr.mxu0 %v446
    %549 = vmatpush1.msra.mxu0 %v445
    %550 = vmatprep.subr.mxu0 %v448
    %551 = vmatpush1.msra.mxu0 %v447
    %552 = vmatprep.subr.mxu0 %v450
    %553 = vmatpush1.msra.mxu0 %v449
    %554 = vmatprep.subr.mxu0 %v452
    %555 = vmatpush1.msra.mxu0 %v451
    %556 = vmatprep.subr.mxu0 %v454
    %557 = vmatpush1.msra.mxu0 %v453
    %558 = vmatprep.mubr.f32.mxu0 %v491
    %559 = vmatmul.mubr.f32.gmra.mrb[0].mxu0 %v484
    %v560 = vpop.f32.mrb[0].mxu0
    %v561 = vadd.f32 0.0, %v560
    %v562 = vpop.f32.mrb[0].mxu0
    %v563 = vadd.f32 0.0, %v562
    %564 = vdwg.mxu0
    %v581 = vsel %vm471, %v123, %v109
    %v582 = vsel %vm473, %v137, %v581
    %v583 = vsel %vm475, %v151, %v582
    %v584 = vsel %vm477, %v165, %v583
    %v585 = vsel %vm479, %v179, %v584
    %v586 = vsel %vm481, %v193, %v585
    %v587 = vsel %vm483, %v207, %v586
    %v588 = vsel %vm471, %v130, %v116
    %v589 = vsel %vm473, %v144, %v588
    %v590 = vsel %vm475, %v158, %v589
    %v591 = vsel %vm477, %v172, %v590
    %v592 = vsel %vm479, %v186, %v591
    %v593 = vsel %vm481, %v200, %v592
    %v594 = vsel %vm483, %v214, %v593
    %597 = vmatprep.subr.mxu0 %v328
    %598 = vmatpush1.msra.mxu0 %v327
    %599 = vmatprep.subr.mxu0 %v330
    %600 = vmatpush1.msra.mxu0 %v329
    %601 = vmatprep.subr.mxu0 %v332
    %602 = vmatpush1.msra.mxu0 %v331
    %603 = vmatprep.subr.mxu0 %v334
    %604 = vmatpush1.msra.mxu0 %v333
    %605 = vmatprep.subr.mxu0 %v336
    %606 = vmatpush1.msra.mxu0 %v335
    %607 = vmatprep.subr.mxu0 %v338
    %608 = vmatpush1.msra.mxu0 %v337
    %609 = vmatprep.subr.mxu0 %v340
    %610 = vmatpush1.msra.mxu0 %v339
    %611 = vmatprep.subr.mxu0 %v342
    %612 = vmatpush1.msra.mxu0 %v341
    %613 = vmatprep.subr.mxu0 %v344
    %614 = vmatpush1.msra.mxu0 %v343
    %615 = vmatprep.subr.mxu0 %v346
    %616 = vmatpush1.msra.mxu0 %v345
    %617 = vmatprep.subr.mxu0 %v348
    %618 = vmatpush1.msra.mxu0 %v347
    %619 = vmatprep.subr.mxu0 %v350
    %620 = vmatpush1.msra.mxu0 %v349
    %621 = vmatprep.subr.mxu0 %v352
    %622 = vmatpush1.msra.mxu0 %v351
    %623 = vmatprep.subr.mxu0 %v354
    %624 = vmatpush1.msra.mxu0 %v353
    %625 = vmatprep.subr.mxu0 %v356
    %626 = vmatpush1.msra.mxu0 %v355
    %627 = vmatprep.subr.mxu0 %v358
    %628 = vmatpush1.msra.mxu0 %v357
    %629 = vmatprep.subr.mxu0 %v360
    %630 = vmatpush1.msra.mxu0 %v359
    %631 = vmatprep.subr.mxu0 %v362
    %632 = vmatpush1.msra.mxu0 %v361
    %633 = vmatprep.subr.mxu0 %v364
    %634 = vmatpush1.msra.mxu0 %v363
    %635 = vmatprep.subr.mxu0 %v366
    %636 = vmatpush1.msra.mxu0 %v365
    %637 = vmatprep.subr.mxu0 %v368
    %638 = vmatpush1.msra.mxu0 %v367
    %639 = vmatprep.subr.mxu0 %v370
    %640 = vmatpush1.msra.mxu0 %v369
    %641 = vmatprep.subr.mxu0 %v372
    %642 = vmatpush1.msra.mxu0 %v371
    %643 = vmatprep.subr.mxu0 %v374
    %644 = vmatpush1.msra.mxu0 %v373
    %645 = vmatprep.subr.mxu0 %v376
    %646 = vmatpush1.msra.mxu0 %v375
    %647 = vmatprep.subr.mxu0 %v378
    %648 = vmatpush1.msra.mxu0 %v377
    %649 = vmatprep.subr.mxu0 %v380
    %650 = vmatpush1.msra.mxu0 %v379
    %651 = vmatprep.subr.mxu0 %v382
    %652 = vmatpush1.msra.mxu0 %v381
    %653 = vmatprep.subr.mxu0 %v384
    %654 = vmatpush1.msra.mxu0 %v383
    %655 = vmatprep.subr.mxu0 %v386
    %656 = vmatpush1.msra.mxu0 %v385
    %657 = vmatprep.subr.mxu0 %v388
    %658 = vmatpush1.msra.mxu0 %v387
    %659 = vmatprep.subr.mxu0 %v390
    %660 = vmatpush1.msra.mxu0 %v389
    %661 = vmatprep.mubr.f32.mxu0 %v594
    %662 = vmatmul.mubr.f32.gmra.mrb[0].mxu0 %v587
    %v663 = vpop.f32.mrb[0].mxu0
    %v664 = vadd.f32 %v561, %v663
    %v665 = vpop.f32.mrb[0].mxu0
    %v666 = vadd.f32 %v563, %v665
    %667 = vdwg.mxu0
    %v668 = vld [vmem:[%s3] sm:$0x3]
    %v670 = vlaneseq
    %v671 = vshrl.u32 %v670, 7
    %v672 = vsub.s32 0, %v671
    %v673 = vrot.slane %v668, %v672
    %v674 = vlaneseq
    %v675 = vshrl.u32 %v674, 7
    %v676 = vsub.s32 1, %v675
    %v677 = vrot.slane %v668, %v676
    %v680 = vadd.f32 %v664, %v673
    %v681 = vadd.f32 %v666, %v677
    %v682 = vmax.f32 %v680, 0.0
    %v683 = vmax.f32 %v681, 0.0
    %v684 = vld [vmem:[#allocation5] sm:$0xff]
    %v685 = vld [vmem:[#allocation5 + $0x8] sm:$0xff]
    %v686 = vld [vmem:[#allocation5 + $0x10] sm:$0xff]
    %v687 = vld [vmem:[#allocation5 + $0x18] sm:$0xff]
    %v688 = vld [vmem:[#allocation5 + $0x20] sm:$0xff]
    %v689 = vld [vmem:[#allocation5 + $0x28] sm:$0xff]
    %v690 = vld [vmem:[#allocation5 + $0x30] sm:$0xff]
    %v691 = vld [vmem:[#allocation5 + $0x38] sm:$0xff]
    %v692 = vld [vmem:[#allocation5 + $0x40] sm:$0xff]
    %v693 = vld [vmem:[#allocation5 + $0x48] sm:$0xff]
    %v694 = vld [vmem:[#allocation5 + $0x50] sm:$0xff]
    %v695 = vld [vmem:[#allocation5 + $0x58] sm:$0xff]
    %v696 = vld [vmem:[#allocation5 + $0x60] sm:$0xff]
    %v697 = vld [vmem:[#allocation5 + $0x68] sm:$0xff]
    %v698 = vld [vmem:[#allocation5 + $0x70] sm:$0xff]
    %v699 = vld [vmem:[#allocation5 + $0x78] sm:$0xff]
    %v700 = vld [vmem:[#allocation5 + $0x80] sm:$0xff]
    %v701 = vld [vmem:[#allocation5 + $0x88] sm:$0xff]
    %v702 = vld [vmem:[#allocation5 + $0x90] sm:$0xff]
    %v703 = vld [vmem:[#allocation5 + $0x98] sm:$0xff]
    %v704 = vld [vmem:[#allocation5 + $0xa0] sm:$0xff]
    %v705 = vld [vmem:[#allocation5 + $0xa8] sm:$0xff]
    %v706 = vld [vmem:[#allocation5 + $0xb0] sm:$0xff]
    %v707 = vld [vmem:[#allocation5 + $0xb8] sm:$0xff]
    %v708 = vld [vmem:[#allocation5 + $0xc0] sm:$0xff]
    %v709 = vld [vmem:[#allocation5 + $0xc8] sm:$0xff]
    %v710 = vld [vmem:[#allocation5 + $0xd0] sm:$0xff]
    %v711 = vld [vmem:[#allocation5 + $0xd8] sm:$0xff]
    %v712 = vld [vmem:[#allocation5 + $0xe0] sm:$0xff]
    %v713 = vld [vmem:[#allocation5 + $0xe8] sm:$0xff]
    %v714 = vld [vmem:[#allocation5 + $0xf0] sm:$0xff]
    %v715 = vld [vmem:[#allocation5 + $0xf8] sm:$0xff]
    %v716 = vld [vmem:[%s5] sm:$0x1]
    %v718 = vlaneseq
    %v719 = vshrl.u32 %v718, 7
    %v720 = vsub.s32 0, %v719
    %v721 = vrot.slane %v716, %v720
    %723 = vmatprep.subr.mxu0 0.0
    %724 = vmatpush1.msra.mxu0 %v684
    %725 = vmatprep.subr.mxu0 0.0
    %726 = vmatpush1.msra.mxu0 %v685
    %727 = vmatprep.subr.mxu0 0.0
    %728 = vmatpush1.msra.mxu0 %v686
    %729 = vmatprep.subr.mxu0 0.0
    %730 = vmatpush1.msra.mxu0 %v687
    %731 = vmatprep.subr.mxu0 0.0
    %732 = vmatpush1.msra.mxu0 %v688
    %733 = vmatprep.subr.mxu0 0.0
    %734 = vmatpush1.msra.mxu0 %v689
    %735 = vmatprep.subr.mxu0 0.0
    %736 = vmatpush1.msra.mxu0 %v690
    %737 = vmatprep.subr.mxu0 0.0
    %738 = vmatpush1.msra.mxu0 %v691
    %739 = vmatprep.subr.mxu0 0.0
    %740 = vmatpush1.msra.mxu0 %v692
    %741 = vmatprep.subr.mxu0 0.0
    %742 = vmatpush1.msra.mxu0 %v693
    %743 = vmatprep.subr.mxu0 0.0
    %744 = vmatpush1.msra.mxu0 %v694
    %745 = vmatprep.subr.mxu0 0.0
    %746 = vmatpush1.msra.mxu0 %v695
    %747 = vmatprep.subr.mxu0 0.0
    %748 = vmatpush1.msra.mxu0 %v696
    %749 = vmatprep.subr.mxu0 0.0
    %750 = vmatpush1.msra.mxu0 %v697
    %751 = vmatprep.subr.mxu0 0.0
    %752 = vmatpush1.msra.mxu0 %v698
    %753 = vmatprep.subr.mxu0 0.0
    %754 = vmatpush1.msra.mxu0 %v699
    %755 = vmatprep.subr.mxu0 0.0
    %756 = vmatpush1.msra.mxu0 %v700
    %757 = vmatprep.subr.mxu0 0.0
    %758 = vmatpush1.msra.mxu0 %v701
    %759 = vmatprep.subr.mxu0 0.0
    %760 = vmatpush1.msra.mxu0 %v702
    %761 = vmatprep.subr.mxu0 0.0
    %762 = vmatpush1.msra.mxu0 %v703
    %763 = vmatprep.subr.mxu0 0.0
    %764 = vmatpush1.msra.mxu0 %v704
    %765 = vmatprep.subr.mxu0 0.0
    %766 = vmatpush1.msra.mxu0 %v705
    %767 = vmatprep.subr.mxu0 0.0
    %768 = vmatpush1.msra.mxu0 %v706
    %769 = vmatprep.subr.mxu0 0.0
    %770 = vmatpush1.msra.mxu0 %v707
    %771 = vmatprep.subr.mxu0 0.0
    %772 = vmatpush1.msra.mxu0 %v708
    %773 = vmatprep.subr.mxu0 0.0
    %774 = vmatpush1.msra.mxu0 %v709
    %775 = vmatprep.subr.mxu0 0.0
    %776 = vmatpush1.msra.mxu0 %v710
    %777 = vmatprep.subr.mxu0 0.0
    %778 = vmatpush1.msra.mxu0 %v711
    %779 = vmatprep.subr.mxu0 0.0
    %780 = vmatpush1.msra.mxu0 %v712
    %781 = vmatprep.subr.mxu0 0.0
    %782 = vmatpush1.msra.mxu0 %v713
    %783 = vmatprep.subr.mxu0 0.0
    %784 = vmatpush1.msra.mxu0 %v714
    %785 = vmatprep.subr.mxu0 0.0
    %786 = vmatpush1.msra.mxu0 %v715
    %787 = vmatprep.mubr.f32.mxu0 %v683
    %788 = vmatmul.mubr.f32.gmra.mrb[0].mxu0 %v682
    %v789 = vpop.f32.mrb[0].mxu0
    %v790 = vadd.f32 %v721, %v789
    %v791 = vpop.f32.mrb[0].mxu0
    %792 = vdwg.mxu0
    %v793 = vmax.f32 %v790, 0.0
    %v794 = vld [vmem:[#allocation7] sm:$0xff]
    %v795 = vld [vmem:[#allocation7 + $0x8] sm:$0xff]
    %v796 = vld [vmem:[#allocation7 + $0x10] sm:$0xff]
    %v797 = vld [vmem:[#allocation7 + $0x18] sm:$0xff]
    %v798 = vld [vmem:[#allocation7 + $0x20] sm:$0xff]
    %v799 = vld [vmem:[#allocation7 + $0x28] sm:$0xff]
    %v800 = vld [vmem:[#allocation7 + $0x30] sm:$0xff]
    %v801 = vld [vmem:[#allocation7 + $0x38] sm:$0xff]
    %v802 = vld [vmem:[#allocation7 + $0x40] sm:$0xff]
    %v803 = vld [vmem:[#allocation7 + $0x48] sm:$0xff]
    %v804 = vld [vmem:[#allocation7 + $0x50] sm:$0xff]
    %v805 = vld [vmem:[#allocation7 + $0x58] sm:$0xff]
    %v806 = vld [vmem:[#allocation7 + $0x60] sm:$0xff]
    %v807 = vld [vmem:[#allocation7 + $0x68] sm:$0xff]
    %v808 = vld [vmem:[#allocation7 + $0x70] sm:$0xff]
    %v809 = vld [vmem:[#allocation7 + $0x78] sm:$0xff]
    %v810 = vld [vmem:[%s7] sm:$0x1]
    %v812 = vlaneseq
    %v813 = vshrl.u32 %v812, 7
    %v814 = vsub.s32 0, %v813
    %v815 = vrot.slane %v810, %v814
    %817 = vmatprep.subr.mxu0 0.0
    %818 = vmatpush1.msra.mxu0 %v794
    %819 = vmatprep.subr.mxu0 0.0
    %820 = vmatpush1.msra.mxu0 %v795
    %821 = vmatprep.subr.mxu0 0.0
    %822 = vmatpush1.msra.mxu0 %v796
    %823 = vmatprep.subr.mxu0 0.0
    %824 = vmatpush1.msra.mxu0 %v797
    %825 = vmatprep.subr.mxu0 0.0
    %826 = vmatpush1.msra.mxu0 %v798
    %827 = vmatprep.subr.mxu0 0.0
    %828 = vmatpush1.msra.mxu0 %v799
    %829 = vmatprep.subr.mxu0 0.0
    %830 = vmatpush1.msra.mxu0 %v800
    %831 = vmatprep.subr.mxu0 0.0
    %832 = vmatpush1.msra.mxu0 %v801
    %833 = vmatprep.subr.mxu0 0.0
    %834 = vmatpush1.msra.mxu0 %v802
    %835 = vmatprep.subr.mxu0 0.0
    %836 = vmatpush1.msra.mxu0 %v803
    %837 = vmatprep.subr.mxu0 0.0
    %838 = vmatpush1.msra.mxu0 %v804
    %839 = vmatprep.subr.mxu0 0.0
    %840 = vmatpush1.msra.mxu0 %v805
    %841 = vmatprep.subr.mxu0 0.0
    %842 = vmatpush1.msra.mxu0 %v806
    %843 = vmatprep.subr.mxu0 0.0
    %844 = vmatpush1.msra.mxu0 %v807
    %845 = vmatprep.subr.mxu0 0.0
    %846 = vmatpush1.msra.mxu0 %v808
    %847 = vmatprep.subr.mxu0 0.0
    %848 = vmatpush1.msra.mxu0 %v809
    %849 = vmatprep.subr.mxu0 0.0
    %850 = vmatpush1.msra.mxu0 0.0
    %851 = vmatprep.subr.mxu0 0.0
    %852 = vmatpush1.msra.mxu0 0.0
    %853 = vmatprep.subr.mxu0 0.0
    %854 = vmatpush1.msra.mxu0 0.0
    %855 = vmatprep.subr.mxu0 0.0
    %856 = vmatpush1.msra.mxu0 0.0
    %857 = vmatprep.subr.mxu0 0.0
    %858 = vmatpush1.msra.mxu0 0.0
    %859 = vmatprep.subr.mxu0 0.0
    %860 = vmatpush1.msra.mxu0 0.0
    %861 = vmatprep.subr.mxu0 0.0
    %862 = vmatpush1.msra.mxu0 0.0
    %863 = vmatprep.subr.mxu0 0.0
    %864 = vmatpush1.msra.mxu0 0.0
    %865 = vmatprep.subr.mxu0 0.0
    %866 = vmatpush1.msra.mxu0 0.0
    %867 = vmatprep.subr.mxu0 0.0
    %868 = vmatpush1.msra.mxu0 0.0
    %869 = vmatprep.subr.mxu0 0.0
    %870 = vmatpush1.msra.mxu0 0.0
    %871 = vmatprep.subr.mxu0 0.0
    %872 = vmatpush1.msra.mxu0 0.0
    %873 = vmatprep.subr.mxu0 0.0
    %874 = vmatpush1.msra.mxu0 0.0
    %875 = vmatprep.subr.mxu0 0.0
    %876 = vmatpush1.msra.mxu0 0.0
    %877 = vmatprep.subr.mxu0 0.0
    %878 = vmatpush1.msra.mxu0 0.0
    %879 = vmatprep.subr.mxu0 0.0
    %880 = vmatpush1.msra.mxu0 0.0
    %881 = vmatprep.mubr.f32.mxu0 0.0
    %882 = vmatmul.mubr.f32.gmra.mrb[0].mxu0 %v793
    %v883 = vpop.f32.mrb[0].mxu0
    %v884 = vadd.f32 %v815, %v883
    %v885 = vpop.f32.mrb[0].mxu0
    %886 = vdwg.mxu0
    %887 = vst [vmem:[#allocation8] sm:$0xff] %v884
    // Predicated region
    $region46: #{residual_flower_forward.1} parent=1 // pred_check
      _
    $region47: #{residual_flower_forward.1} parent=1 // pred_check_branch
      %889 = sbr.rel (0) target = $region49
    $region48: #{residual_flower_forward.1} parent=1 // pred_region
      %s891 = ssub.s32 128, 128
      %892 = vsyncadd [#allocation4], %s891
      %s894 = sshll.u32 [#allocation8], 4
      %s895 = int_to_ptr.vmem [resolvable:$true] %s894
      %897 = dma.vmem_to_hbm [thread:$0]  %s895, 128, %s8, [#allocation4]
    $region49: #{residual_flower_forward.1} parent=1 // pred_fallthru
      _
    // Predicated region
    $region50: #{residual_flower_forward.1} parent=1 // pred_check
      _
    $region51: #{residual_flower_forward.1} parent=1 // pred_check_branch
      %899 = sbr.rel (0) target = $region53
    $region52: #{residual_flower_forward.1} parent=1 // pred_region
      %900 = dma.done [#allocation4], 128
    $region53: #{residual_flower_forward.1} parent=1 // pred_fallthru
      _
    %901 = vsyncpa [#allocation3], 1
    %902 = vsyncpa [#allocation6], 1
    %903 = vsyncpa [#allocation4], 1

</llo_original>
